<compile_context>
chip_gen: v7x
topology: tpu7x:2x2x1
jax: 0.10.0
libtpu: 0.0.40
codegen_flags: <defaults>
</compile_context>

<pallas_src>
import math
import jax
import jax.numpy as jnp
from jax.experimental import pallas as pl
from jax.experimental.pallas import tpu as pltpu

LANE = 128       # TPU lane width; hidden widths are padded to this.
N_LAYERS = 4


def _round_up(n, m):
    return ((n + m - 1) // m) * m


def dqn_kernel(x_ref, w1_ref, w_ref, b_ref, o_ref):
    """Fused 4-layer MLP on one (TB, state_dim) batch tile.

    x_ref : (TB, S)        input tile, natural last dim (bf16 or f32)
    w1_ref: (S, 128)       layer-1 weight, natural contraction dim
    w_ref : (3, 128, 128)  layers 2..4 weights, zero-padded to 128x128
    b_ref : (4, 1, 128)    biases (f32), zero-padded
    o_ref : (TB, A)        output tile, natural last dim (f32)
    """
    w_dtype = w1_ref.dtype
    # Layer 1: (TB, S) x (S, 128) with f32 accumulation; bias + ReLU in f32.
    h = jnp.dot(x_ref[...], w1_ref[...], preferred_element_type=jnp.float32)
    h = jnp.maximum(h + b_ref[0], 0.0)
    # Layers 2..4 on lane-dense 128-wide activations (zero-padded cols stay 0).
    for l in range(N_LAYERS - 1):
        z = jnp.dot(h.astype(w_dtype), w_ref[l],
                    preferred_element_type=jnp.float32)
        z = z + b_ref[l + 1]
        h = jnp.maximum(z, 0.0) if l < N_LAYERS - 2 else z
    # Store only the real action_dim lanes (masked vst, ~32x fewer HBM bytes).
    o_ref[...] = h[:, :o_ref.shape[-1]].astype(o_ref.dtype)


def pack_params(params, state_dim, action_dim, dtype=jnp.bfloat16):
    """Pack the 8 weight/bias arrays into 3 buffers (=> 3 resident DMAs).

    w1    : (state_dim, 128)  natural shape (no lane padding of the input K)
    w_rest: (3, 128, 128)     layers 2..4, zero-padded
    b_pack: (4, 1, 128)       f32 biases, zero-padded
    """
    dims = [(state_dim, 128), (128, 64), (64, 32), (32, action_dim)]
    w1 = params["w1"].astype(dtype)
    w_rest = jnp.zeros((N_LAYERS - 1, LANE, LANE), dtype)
    b_pack = jnp.zeros((N_LAYERS, 1, LANE), jnp.float32)
    b_pack = b_pack.at[0, 0, :128].set(params["b1"][0].astype(jnp.float32))
    for l in range(1, N_LAYERS):
        din, dout = dims[l]
        w_rest = w_rest.at[l - 1, :din, :dout].set(
            params[f"w{l+1}"].astype(dtype))
        b_pack = b_pack.at[l, 0, :dout].set(
            params[f"b{l+1}"][0].astype(jnp.float32))
    return w1, w_rest, b_pack


def dqn_forward(x, params, *, block_b=1024, use_bf16=True, min_grid_steps=2):
    """Fused DQN forward.  x: (B, state_dim) f32.  params: dict of W/b arrays.

    use_bf16=True (default) casts MXU operands (x, weights) to bf16 — the fast
    path on all TPU generations; accumulation, bias-add and ReLU stay in f32.
    """
    B, state_dim = x.shape
    action_dim = params["w4"].shape[1]
    assert action_dim <= LANE, "action_dim > 128 would need an N-tiled last layer"

    compute_dtype = jnp.bfloat16 if use_bf16 else jnp.float32
    w1, w_rest, b_pack = pack_params(params, state_dim, action_dim, compute_dtype)

    # Adaptive batch tile: cap at block_b, keep per-tile padding < 8 rows, and
    # guarantee >= min_grid_steps so the parallel axis feeds both v7x cores.
    num_tiles = max(min_grid_steps, pl.cdiv(B, block_b))
    tb = _round_up(pl.cdiv(B, num_tiles), 8)
    b_pad = num_tiles * tb

    # Only (b_pad - B) zero rows of width state_dim are added — no 128-lane slab.
    x_in = jnp.pad(x.astype(compute_dtype), ((0, b_pad - B), (0, 0)))

    out_padded = pl.pallas_call(
        dqn_kernel,
        out_shape=jax.ShapeDtypeStruct((b_pad, action_dim), jnp.float32),
        grid=(num_tiles,),
        in_specs=[
            # activations: tiled along the batch axis, natural last dim
            pl.BlockSpec((tb, state_dim), lambda i: (i, 0)),
            # layer-1 weight + packed layers 2..4 + biases: constant index_map
            # -> DMA'd once, stay VMEM-resident across the whole grid
            pl.BlockSpec((state_dim, LANE), lambda i: (0, 0)),
            pl.BlockSpec((N_LAYERS - 1, LANE, LANE), lambda i: (0, 0, 0)),
            pl.BlockSpec((N_LAYERS, 1, LANE), lambda i: (0, 0, 0)),
        ],
        out_specs=pl.BlockSpec((tb, action_dim), lambda i: (i, 0)),
        compiler_params=pltpu.CompilerParams(
            dimension_semantics=("parallel",)),   # shards batch across v7x TCs
    )(x_in, w1, w_rest, b_pack)

    return out_padded[:B]   # trim padded batch rows only (lanes already exact)


def init_params(key, state_dim, action_dim):
    """Deterministic init mimicking PyTorch nn.Linear default U(+-1/sqrt(fan_in))."""
    dims = [(state_dim, 128), (128, 64), (64, 32), (32, action_dim)]
    params = {}
    for i, (fan_in, fan_out) in enumerate(dims, start=1):
        key, kw, kb = jax.random.split(key, 3)
        bound = 1.0 / math.sqrt(fan_in)
        params[f"w{i}"] = jax.random.uniform(
            kw, (fan_in, fan_out), jnp.float32, minval=-bound, maxval=bound)
        params[f"b{i}"] = jax.random.uniform(
            kb, (1, fan_out), jnp.float32, minval=-bound, maxval=bound)
    return params


def dqn_reference(x, params):
    h = jnp.maximum(x @ params["w1"] + params["b1"], 0.0)
    h = jnp.maximum(h @ params["w2"] + params["b2"], 0.0)
    h = jnp.maximum(h @ params["w3"] + params["b3"], 0.0)
    return h @ params["w4"] + params["b4"]


if __name__ == "__main__":
    key = jax.random.PRNGKey(0)
    batch, state_dim, action_dim = 8, 8, 4

    key, kx = jax.random.split(key)
    x = jax.random.normal(kx, (batch, state_dim), dtype=jnp.float32)
    params = init_params(key, state_dim, action_dim)
    ref = dqn_reference(x, params)

    # f32 MXU-operand path: tight match against the reference.
    out_f32 = jax.block_until_ready(dqn_forward(x, params, use_bf16=False))
    assert out_f32.shape == (batch, action_dim)
    assert jnp.allclose(out_f32, ref, atol=2e-5, rtol=2e-5), "f32 mismatch vs reference"

    # Default bf16-operand path (MXU fast path on v5e/v6e/v7x).
    out_bf16 = jax.block_until_ready(dqn_forward(x, params))
    rel_err = jnp.max(jnp.abs(out_bf16 - ref)) / (jnp.max(jnp.abs(ref)) + 1e-6)
    assert rel_err < 5e-2, f"bf16 path too far from reference: {rel_err}"

    # Non-multiple batch exercises adaptive tiling + multi-step parallel grid.
    key, kx2 = jax.random.split(key)
    x2 = jax.random.normal(kx2, (300, state_dim), dtype=jnp.float32)
    out2 = jax.block_until_ready(
        dqn_forward(x2, params, block_b=128, use_bf16=False))
    assert out2.shape == (300, action_dim)
    assert jnp.allclose(out2, dqn_reference(x2, params), atol=2e-5, rtol=2e-5), \
        "gridded f32 mismatch vs reference"

    print("KERNEL_OK")
</pallas_src>

<mosaic_0001>
module attributes {stable_mosaic.version = 11 : i64} {
  func.func @dqn_kernel(%arg0: i32, %arg1: memref<8x8xf32, #tpu.memory_space<vmem>>, %arg2: memref<8x128xf32, #tpu.memory_space<vmem>>, %arg3: memref<3x128x128xf32, #tpu.memory_space<vmem>>, %arg4: memref<4x1x128xf32, #tpu.memory_space<vmem>>, %arg5: memref<8x4xf32, #tpu.memory_space<vmem>>) attributes {dimension_semantics = [#tpu.dimension_semantics<parallel>], iteration_bounds = array<i64: 2>, scalar_prefetch = 0 : i64, scratch_operands = 0 : i64, tpu.core_type = #tpu.core_type<tc>, window_params = [{transform_indices = @transform_0, window_bounds = array<i64: 8, 8>}, {pipeline_mode = #tpu.pipeline_mode<synchronous>, transform_indices = @transform_1, window_bounds = array<i64: 8, 128>}, {pipeline_mode = #tpu.pipeline_mode<synchronous>, transform_indices = @transform_2, window_bounds = array<i64: 3, 128, 128>}, {pipeline_mode = #tpu.pipeline_mode<synchronous>, transform_indices = @transform_3, window_bounds = array<i64: 4, 1, 128>}, {transform_indices = @transform_4, window_bounds = array<i64: 8, 4>}]} {
    %c0 = arith.constant 0 : index
    %c0_0 = arith.constant 0 : index
    %0 = vector.load %arg1[%c0, %c0_0] : memref<8x8xf32, #tpu.memory_space<vmem>>, vector<8x8xf32>
    %c0_1 = arith.constant 0 : index
    %c0_2 = arith.constant 0 : index
    %1 = vector.load %arg2[%c0_1, %c0_2] : memref<8x128xf32, #tpu.memory_space<vmem>>, vector<8x128xf32>
    %cst = arith.constant dense<0.000000e+00> : vector<8x128xf32>
    %2 = tpu.matmul %0, %1, %cst {dimension_numbers = #tpu.dot_dimension_numbers<[1], [0], [0], [1], [0, 0, 1, 1], [], []>} : vector<8x8xf32>, vector<8x128xf32>, vector<8x128xf32> -> vector<8x128xf32>
    %c0_3 = arith.constant 0 : index
    %c0_4 = arith.constant 0 : index
    %c0_5 = arith.constant 0 : index
    %3 = vector.load %arg4[%c0_3, %c0_4, %c0_5] : memref<4x1x128xf32, #tpu.memory_space<vmem>>, vector<1x1x128xf32>
    %4 = vector.shape_cast %3 : vector<1x1x128xf32> to vector<1x128xf32>
    %5 = vector.broadcast %4 : vector<1x128xf32> to vector<8x128xf32>
    %6 = arith.addf %2, %5 : vector<8x128xf32>
    %cst_6 = arith.constant 0.000000e+00 : f32
    %7 = vector.broadcast %cst_6 : f32 to vector<8x128xf32>
    %8 = arith.maximumf %6, %7 : vector<8x128xf32>
    %c0_7 = arith.constant 0 : index
    %c0_8 = arith.constant 0 : index
    %c0_9 = arith.constant 0 : index
    %9 = vector.load %arg3[%c0_7, %c0_8, %c0_9] : memref<3x128x128xf32, #tpu.memory_space<vmem>>, vector<1x128x128xf32>
    %10 = vector.shape_cast %9 : vector<1x128x128xf32> to vector<128x128xf32>
    %cst_10 = arith.constant dense<0.000000e+00> : vector<8x128xf32>
    %11 = tpu.matmul %8, %10, %cst_10 {dimension_numbers = #tpu.dot_dimension_numbers<[1], [0], [0], [1], [0, 0, 1, 1], [], []>} : vector<8x128xf32>, vector<128x128xf32>, vector<8x128xf32> -> vector<8x128xf32>
    %c1 = arith.constant 1 : index
    %c0_11 = arith.constant 0 : index
    %c0_12 = arith.constant 0 : index
    %12 = vector.load %arg4[%c1, %c0_11, %c0_12] : memref<4x1x128xf32, #tpu.memory_space<vmem>>, vector<1x1x128xf32>
    %13 = vector.shape_cast %12 : vector<1x1x128xf32> to vector<1x128xf32>
    %14 = vector.broadcast %13 : vector<1x128xf32> to vector<8x128xf32>
    %15 = arith.addf %11, %14 : vector<8x128xf32>
    %cst_13 = arith.constant 0.000000e+00 : f32
    %16 = vector.broadcast %cst_13 : f32 to vector<8x128xf32>
    %17 = arith.maximumf %15, %16 : vector<8x128xf32>
    %c1_14 = arith.constant 1 : index
    %c0_15 = arith.constant 0 : index
    %c0_16 = arith.constant 0 : index
    %18 = vector.load %arg3[%c1_14, %c0_15, %c0_16] : memref<3x128x128xf32, #tpu.memory_space<vmem>>, vector<1x128x128xf32>
    %19 = vector.shape_cast %18 : vector<1x128x128xf32> to vector<128x128xf32>
    %cst_17 = arith.constant dense<0.000000e+00> : vector<8x128xf32>
    %20 = tpu.matmul %17, %19, %cst_17 {dimension_numbers = #tpu.dot_dimension_numbers<[1], [0], [0], [1], [0, 0, 1, 1], [], []>} : vector<8x128xf32>, vector<128x128xf32>, vector<8x128xf32> -> vector<8x128xf32>
    %c2 = arith.constant 2 : index
    %c0_18 = arith.constant 0 : index
    %c0_19 = arith.constant 0 : index
    %21 = vector.load %arg4[%c2, %c0_18, %c0_19] : memref<4x1x128xf32, #tpu.memory_space<vmem>>, vector<1x1x128xf32>
    %22 = vector.shape_cast %21 : vector<1x1x128xf32> to vector<1x128xf32>
    %23 = vector.broadcast %22 : vector<1x128xf32> to vector<8x128xf32>
    %24 = arith.addf %20, %23 : vector<8x128xf32>
    %cst_20 = arith.constant 0.000000e+00 : f32
    %25 = vector.broadcast %cst_20 : f32 to vector<8x128xf32>
    %26 = arith.maximumf %24, %25 : vector<8x128xf32>
    %c2_21 = arith.constant 2 : index
    %c0_22 = arith.constant 0 : index
    %c0_23 = arith.constant 0 : index
    %27 = vector.load %arg3[%c2_21, %c0_22, %c0_23] : memref<3x128x128xf32, #tpu.memory_space<vmem>>, vector<1x128x128xf32>
    %28 = vector.shape_cast %27 : vector<1x128x128xf32> to vector<128x128xf32>
    %cst_24 = arith.constant dense<0.000000e+00> : vector<8x128xf32>
    %29 = tpu.matmul %26, %28, %cst_24 {dimension_numbers = #tpu.dot_dimension_numbers<[1], [0], [0], [1], [0, 0, 1, 1], [], []>} : vector<8x128xf32>, vector<128x128xf32>, vector<8x128xf32> -> vector<8x128xf32>
    %c3 = arith.constant 3 : index
    %c0_25 = arith.constant 0 : index
    %c0_26 = arith.constant 0 : index
    %30 = vector.load %arg4[%c3, %c0_25, %c0_26] : memref<4x1x128xf32, #tpu.memory_space<vmem>>, vector<1x1x128xf32>
    %31 = vector.shape_cast %30 : vector<1x1x128xf32> to vector<1x128xf32>
    %32 = vector.broadcast %31 : vector<1x128xf32> to vector<8x128xf32>
    %33 = arith.addf %29, %32 : vector<8x128xf32>
    %34 = vector.extract_strided_slice %33 {offsets = [0, 0], sizes = [8, 4], strides = [1, 1]} : vector<8x128xf32> to vector<8x4xf32>
    %c0_27 = arith.constant 0 : index
    %c0_28 = arith.constant 0 : index
    %35 = vector.load %arg5[%c0_27, %c0_28] : memref<8x4xf32, #tpu.memory_space<vmem>>, vector<8x4xf32>
    tpu.vector_store %arg5[%c0_27, %c0_28], %34 {strides = array<i32>} : memref<8x4xf32, #tpu.memory_space<vmem>>, vector<8x4xf32>,
    return
  }
  func.func @transform_0(%arg0: i32) -> (i32, i32) {
    %c0_i32 = arith.constant 0 : i32
    %c0_i32_0 = arith.constant 0 : i32
    return %arg0, %c0_i32 : i32, i32
  }
  func.func @transform_1(%arg0: i32) -> (i32, i32) {
    %c0_i32 = arith.constant 0 : i32
    %c0_i32_0 = arith.constant 0 : i32
    %c0_i32_1 = arith.constant 0 : i32
    return %c0_i32, %c0_i32_0 : i32, i32
  }
  func.func @transform_2(%arg0: i32) -> (i32, i32, i32) {
    %c0_i32 = arith.constant 0 : i32
    %c0_i32_0 = arith.constant 0 : i32
    %c0_i32_1 = arith.constant 0 : i32
    %c0_i32_2 = arith.constant 0 : i32
    return %c0_i32, %c0_i32_0, %c0_i32_1 : i32, i32, i32
  }
  func.func @transform_3(%arg0: i32) -> (i32, i32, i32) {
    %c0_i32 = arith.constant 0 : i32
    %c0_i32_0 = arith.constant 0 : i32
    %c0_i32_1 = arith.constant 0 : i32
    %c0_i32_2 = arith.constant 0 : i32
    return %c0_i32, %c0_i32_0, %c0_i32_1 : i32, i32, i32
  }
  func.func @transform_4(%arg0: i32) -> (i32, i32) {
    %c0_i32 = arith.constant 0 : i32
    %c0_i32_0 = arith.constant 0 : i32
    return %arg0, %c0_i32 : i32, i32
  }
}

</mosaic_0001>

<llo_original>
// kernel: tpu_custom_call.1
$region0: #{tpu_custom_call.1}
  #allocation0 [shape = 'u32[]', space=smem, size = 0x4, offset = 0x4, fixed_abs, tag = 'smem constant byte address 0x4 - core index']
  #allocation1 [shape = 'u32[144,128]{1,0:T(1,128)}', space=vmem, size = 0x12000, scoped, tag = 'internal scratch']
  %s0 = inlined_call_operand.vmem [shape: f32[16,8], index: 0, kind: input, shape index: {}]
  %s1 = inlined_call_operand.vmem [shape: f32[8,128], index: 1, kind: input, shape index: {}]
  %s2 = inlined_call_operand.hbm [shape: f32[3,128,128], index: 2, kind: input, shape index: {}]
  %s3 = inlined_call_operand.vmem [shape: f32[4,1,128], index: 3, kind: input, shape index: {}]
  %s4 = inlined_call_operand.vmem [shape: f32[16,4], index: 4, kind: output, shape index: {}]
  %s5 = sld [smem:[#allocation0]]
  $region53: #{tpu_custom_call.1} parent=0
    _
  %s7 = ssub.s32 1, %s5
  %s8 = scalar_select 0, %s7, %s5
  $region1: #{tpu_custom_call.1} parent=0
    #allocation2 [shape = 'u8[196608]{0}', space=vmem, size = 0x30000, scoped, tag = 'input window, operand 2, single buffered']
    #allocation3 [shape = 's32[2]{0}', space=sflag, size = 0x8, scoped, tag = 'scoped memory for tpu_custom_call.1']
    %9 = vsyncpa [#allocation3], 0
    loop: start=0, step=1, limit=4
    $region2: #{tpu_custom_call.1} parent=1 // loop_pre_header
      _
    $region3: #{tpu_custom_call.1} parent=1 // loop_header
      %s11 = sphi 0, %s15
      %p12 = scmp.ge.s32.totalorder %s11, 4
      %s21 = sphi 0, %s23
      %s24 = sphi 0, %s21
      %s25 = sphi 0, %s24
      %s41 = sphi 0, %s25
      %s45 = sphi 0, %s45
      %s47 = sphi 0, %s45
      %s48 = sphi 0, %s47
      %s62 = sphi 0, %s48
      %s66 = sphi 0, %s66
      %s68 = sphi 0, %s66
      %s69 = sphi 0, %s68
      %s83 = sphi 0, %s69
      %s87 = sphi 0, %s87
      %s89 = sphi 0, %s87
      %s90 = sphi 0, %s89
      %s104 = sphi 0, %s90
      %s110 = sphi 0, %s112
      %s113 = sphi 0, %s110
      %s114 = sphi 0, %s113
      %s130 = sphi 0, %s114
    $region4: #{tpu_custom_call.1} parent=1 // loop_header_branch
      %14 = sbr.rel (%p12) target = $region8
    $region5: #{tpu_custom_call.1} parent=1 // loop_body
      %s16 = ssub.s32 %s11, 1
      %s17 = ssub.s32 %s11, 2
      %s18 = sadd.s32 %s11, 1
      %s19 = ssub.s32 %s11, %s18
      %p20 = scmp.eq.s32.totalorder %s19, 0
      %s22 = sadd.s32 %s21, 1
      %s23 = scalar_select %p20, %s21, %s22
      %p26 = pneg %p20
      %p27 = scmp.eq.s32.totalorder %s11, 1
      %p28 = por %p26, %p27
      %p29 = scmp.ne.s32.totalorder %s21, %s24
      %p30 = scmp.eq.s32.totalorder %s11, 0
      %p31 = por %p29, %p30
      %p32 = scmp.ne.s32.totalorder %s21, %s24
      %p33 = scmp.eq.s32.totalorder %s16, 1
      %p34 = por %p32, %p33
      %p35 = scmp.ne.s32.totalorder %s24, %s25
      %p36 = scmp.eq.s32.totalorder %s16, 0
      %p37 = por %p35, %p36
      %p38 = scmp.ne.s32.totalorder %s24, %s25
      %p39 = scmp.eq.s32.totalorder %s17, 1
      %p40 = por %p38, %p39
      %p42 = scmp.ne.s32.totalorder %s25, %s41
      %p43 = scmp.eq.s32.totalorder %s17, 0
      %p44 = por %p42, %p43
      %s46 = sadd.s32 %s45, 1
      %p49 = scmp.eq.s32.totalorder %s11, 1
      %p50 = scmp.ne.s32.totalorder %s45, %s47
      %p51 = scmp.eq.s32.totalorder %s11, 0
      %p52 = por %p50, %p51
      %p53 = scmp.ne.s32.totalorder %s45, %s47
      %p54 = scmp.eq.s32.totalorder %s16, 1
      %p55 = por %p53, %p54
      %p56 = scmp.ne.s32.totalorder %s47, %s48
      %p57 = scmp.eq.s32.totalorder %s16, 0
      %p58 = por %p56, %p57
      %p59 = scmp.ne.s32.totalorder %s47, %s48
      %p60 = scmp.eq.s32.totalorder %s17, 1
      %p61 = por %p59, %p60
      %p63 = scmp.ne.s32.totalorder %s48, %s62
      %p64 = scmp.eq.s32.totalorder %s17, 0
      %p65 = por %p63, %p64
      %s67 = sadd.s32 %s66, 1
      %p70 = scmp.eq.s32.totalorder %s11, 1
      %p71 = scmp.ne.s32.totalorder %s66, %s68
      %p72 = scmp.eq.s32.totalorder %s11, 0
      %p73 = por %p71, %p72
      %p74 = scmp.ne.s32.totalorder %s66, %s68
      %p75 = scmp.eq.s32.totalorder %s16, 1
      %p76 = por %p74, %p75
      %p77 = scmp.ne.s32.totalorder %s68, %s69
      %p78 = scmp.eq.s32.totalorder %s16, 0
      %p79 = por %p77, %p78
      %p80 = scmp.ne.s32.totalorder %s68, %s69
      %p81 = scmp.eq.s32.totalorder %s17, 1
      %p82 = por %p80, %p81
      %p84 = scmp.ne.s32.totalorder %s69, %s83
      %p85 = scmp.eq.s32.totalorder %s17, 0
      %p86 = por %p84, %p85
      %s88 = sadd.s32 %s87, 1
      %p91 = scmp.eq.s32.totalorder %s11, 1
      %p92 = scmp.ne.s32.totalorder %s87, %s89
      %p93 = scmp.eq.s32.totalorder %s11, 0
      %p94 = por %p92, %p93
      %p95 = scmp.ne.s32.totalorder %s87, %s89
      %p96 = scmp.eq.s32.totalorder %s16, 1
      %p97 = por %p95, %p96
      %p98 = scmp.ne.s32.totalorder %s89, %s90
      %p99 = scmp.eq.s32.totalorder %s16, 0
      %p100 = por %p98, %p99
      %p101 = scmp.ne.s32.totalorder %s89, %s90
      %p102 = scmp.eq.s32.totalorder %s17, 1
      %p103 = por %p101, %p102
      %p105 = scmp.ne.s32.totalorder %s90, %s104
      %p106 = scmp.eq.s32.totalorder %s17, 0
      %p107 = por %p105, %p106
      %s108 = ssub.s32 %s11, %s18
      %p109 = scmp.eq.s32.totalorder %s108, 0
      %s111 = sadd.s32 %s110, 1
      %s112 = scalar_select %p109, %s110, %s111
      %p115 = pneg %p109
      %p116 = scmp.eq.s32.totalorder %s11, 1
      %p117 = por %p115, %p116
      %p118 = scmp.ne.s32.totalorder %s110, %s113
      %p119 = scmp.eq.s32.totalorder %s11, 0
      %p120 = por %p118, %p119
      %p121 = scmp.ne.s32.totalorder %s110, %s113
      %p122 = scmp.eq.s32.totalorder %s16, 1
      %p123 = por %p121, %p122
      %p124 = scmp.ne.s32.totalorder %s113, %s114
      %p125 = scmp.eq.s32.totalorder %s16, 0
      %p126 = por %p124, %p125
      %p127 = scmp.ne.s32.totalorder %s113, %s114
      %p128 = scmp.eq.s32.totalorder %s17, 1
      %p129 = por %p127, %p128
      %p131 = scmp.ne.s32.totalorder %s114, %s130
      %p132 = scmp.eq.s32.totalorder %s17, 0
      %p133 = por %p131, %p132
      %p134 = scmp.le.s32.totalorder 1, %s11
      %p135 = scmp.lt.s32.totalorder %s11, 3
      %p136 = pnand %p134, %p135
      %p137 = pneg %p136
      // Predicated region
      $region9: #{tpu_custom_call.1} parent=5 // pred_check
        _
      $region10: #{tpu_custom_call.1} parent=5 // pred_check_branch
        %139 = sbr.rel (%p136) target = $region12
      $region11: #{tpu_custom_call.1} parent=5 // pred_region
        %s140 = ssub.s32 %s11, 1
        // Predicated region
        $region13: #{tpu_custom_call.1} parent=11 // pred_check
          %p141 = pneg %p58
        $region14: #{tpu_custom_call.1} parent=11 // pred_check_branch
          %143 = sbr.rel (%p141) target = $region16
        $region15: #{tpu_custom_call.1} parent=11 // pred_region
          _
        $region16: #{tpu_custom_call.1} parent=11 // pred_fallthru
          _
        // Predicated region
        $region17: #{tpu_custom_call.1} parent=11 // pred_check
          %p144 = pneg %p79
        $region18: #{tpu_custom_call.1} parent=11 // pred_check_branch
          %146 = sbr.rel (%p144) target = $region20
        $region19: #{tpu_custom_call.1} parent=11 // pred_region
          %s148 = ssub.s32 6144, 6144
          %149 = vsyncadd [#allocation3], %s148
          %s150 = sshll.u32 [#allocation2], 4
          %s151 = int_to_ptr.vmem [resolvable:$true] %s150
          %156 = dma.hbm_to_vmem [thread:$0]  %s2, 6144, %s151, [#allocation3], 128, 128, 8
        $region20: #{tpu_custom_call.1} parent=11 // pred_fallthru
          _
        // Predicated region
        $region21: #{tpu_custom_call.1} parent=11 // pred_check
          %p157 = pneg %p100
        $region22: #{tpu_custom_call.1} parent=11 // pred_check_branch
          %159 = sbr.rel (%p157) target = $region24
        $region23: #{tpu_custom_call.1} parent=11 // pred_region
          _
        $region24: #{tpu_custom_call.1} parent=11 // pred_fallthru
          _
      $region12: #{tpu_custom_call.1} parent=5 // pred_fallthru
        _
      %p160 = scmp.lt.s32.totalorder %s11, 2
      // Predicated region
      $region25: #{tpu_custom_call.1} parent=5 // pred_check
        %p161 = pneg %p160
      $region26: #{tpu_custom_call.1} parent=5 // pred_check_branch
        %163 = sbr.rel (%p161) target = $region28
      $region27: #{tpu_custom_call.1} parent=5 // pred_region
        // Predicated region
        $region29: #{tpu_custom_call.1} parent=27 // pred_check
          %p164 = pneg %p31
        $region30: #{tpu_custom_call.1} parent=27 // pred_check_branch
          %166 = sbr.rel (%p164) target = $region32
        $region31: #{tpu_custom_call.1} parent=27 // pred_region
          %p167 = scmp.lt.s32.totalorder %s11, 1
          %s168 = scalar_select %p167, %s11, 1
          %s169 = smul.addr %s168, 8
          %s170 = scalar_lea.vmem %s0, %s169
        $region32: #{tpu_custom_call.1} parent=27 // pred_fallthru
          _
      $region28: #{tpu_custom_call.1} parent=5 // pred_fallthru
        _
      %p171 = scmp.le.s32.totalorder 1, %s11
      %p172 = scmp.lt.s32.totalorder %s11, 3
      %p173 = pnand %p171, %p172
      %p174 = pneg %p173
      // Predicated region
      $region33: #{tpu_custom_call.1} parent=5 // pred_check
        _
      $region34: #{tpu_custom_call.1} parent=5 // pred_check_branch
        %176 = sbr.rel (%p173) target = $region36
      $region35: #{tpu_custom_call.1} parent=5 // pred_region
        %s177 = ssub.s32 %s11, 1
        // Predicated region
        $region37: #{tpu_custom_call.1} parent=35 // pred_check
          %p178 = pneg %p79
        $region38: #{tpu_custom_call.1} parent=35 // pred_check_branch
          %180 = sbr.rel (%p178) target = $region40
        $region39: #{tpu_custom_call.1} parent=35 // pred_region
          %181 = dma.done [#allocation3], 6144
        $region40: #{tpu_custom_call.1} parent=35 // pred_fallthru
          _
        %p182 = scmp.lt.s32.totalorder %s16, 1
        %s183 = scalar_select %p182, %s16, 1
        %s184 = smul.addr %s183, 8
        %s185 = scalar_lea.vmem %s0, %s184
        %p186 = pneg %p37
        %p187 = pneg %p34
        %p188 = pneg %p58
        %p189 = pneg %p55
        %p190 = pneg %p79
        %p191 = pneg %p76
        %p192 = pneg %p100
        %p193 = pneg %p97
        %p194 = pneg %p126
        %p195 = pneg %p123
        %p196 = scmp.lt.s32.totalorder %s16, 1
        %s197 = scalar_select %p196, %s16, 1
        %s198 = smul.addr %s197, 8
        %s199 = scalar_lea.vmem %s4, %s198
        %p200 = scmp.lt.s32.totalorder %s16, 1
        %s201 = scalar_select %p200, %s16, 1
        %s202 = smul.addr %s201, 8
        %s203 = scalar_lea.vmem %s0, %s202
        %p204 = scmp.lt.s32.totalorder %s16, 1
        %s205 = scalar_select %p204, %s16, 1
        %s206 = smul.addr %s205, 8
        %s207 = scalar_lea.vmem %s4, %s206
        %v208 = vld [vmem:[%s203] sm:$0xff]
        %v209 = vld [vmem:[%s1] sm:$0xff]
        %v210 = vld [vmem:[%s3] sm:$0x1]
        %v212 = vlaneseq
        %v213 = vshrl.u32 %v212, 7
        %v214 = vsub.s32 0, %v213
        %v215 = vrot.slane %v210, %v214
        %vm217 = vcmask 64512
        %v219 = vsel %vm217, %v208, 0
        %221 = vmatprep.subr.mxu0 0.0
        %222 = vmatpush1.msra.mxu0 %v209
        %223 = vmatprep.subr.mxu0 0.0
        %224 = vmatpush1.msra.mxu0 0.0
        %225 = vmatprep.subr.mxu0 0.0
        %226 = vmatpush1.msra.mxu0 0.0
        %227 = vmatprep.subr.mxu0 0.0
        %228 = vmatpush1.msra.mxu0 0.0
        %229 = vmatprep.subr.mxu0 0.0
        %230 = vmatpush1.msra.mxu0 0.0
        %231 = vmatprep.subr.mxu0 0.0
        %232 = vmatpush1.msra.mxu0 0.0
        %233 = vmatprep.subr.mxu0 0.0
        %234 = vmatpush1.msra.mxu0 0.0
        %235 = vmatprep.subr.mxu0 0.0
        %236 = vmatpush1.msra.mxu0 0.0
        %237 = vmatprep.subr.mxu0 0.0
        %238 = vmatpush1.msra.mxu0 0.0
        %239 = vmatprep.subr.mxu0 0.0
        %240 = vmatpush1.msra.mxu0 0.0
        %241 = vmatprep.subr.mxu0 0.0
        %242 = vmatpush1.msra.mxu0 0.0
        %243 = vmatprep.subr.mxu0 0.0
        %244 = vmatpush1.msra.mxu0 0.0
        %245 = vmatprep.subr.mxu0 0.0
        %246 = vmatpush1.msra.mxu0 0.0
        %247 = vmatprep.subr.mxu0 0.0
        %248 = vmatpush1.msra.mxu0 0.0
        %249 = vmatprep.subr.mxu0 0.0
        %250 = vmatpush1.msra.mxu0 0.0
        %251 = vmatprep.subr.mxu0 0.0
        %252 = vmatpush1.msra.mxu0 0.0
        %253 = vmatprep.subr.mxu0 0.0
        %254 = vmatpush1.msra.mxu0 0.0
        %255 = vmatprep.subr.mxu0 0.0
        %256 = vmatpush1.msra.mxu0 0.0
        %257 = vmatprep.subr.mxu0 0.0
        %258 = vmatpush1.msra.mxu0 0.0
        %259 = vmatprep.subr.mxu0 0.0
        %260 = vmatpush1.msra.mxu0 0.0
        %261 = vmatprep.subr.mxu0 0.0
        %262 = vmatpush1.msra.mxu0 0.0
        %263 = vmatprep.subr.mxu0 0.0
        %264 = vmatpush1.msra.mxu0 0.0
        %265 = vmatprep.subr.mxu0 0.0
        %266 = vmatpush1.msra.mxu0 0.0
        %267 = vmatprep.subr.mxu0 0.0
        %268 = vmatpush1.msra.mxu0 0.0
        %269 = vmatprep.subr.mxu0 0.0
        %270 = vmatpush1.msra.mxu0 0.0
        %271 = vmatprep.subr.mxu0 0.0
        %272 = vmatpush1.msra.mxu0 0.0
        %273 = vmatprep.subr.mxu0 0.0
        %274 = vmatpush1.msra.mxu0 0.0
        %275 = vmatprep.subr.mxu0 0.0
        %276 = vmatpush1.msra.mxu0 0.0
        %277 = vmatprep.subr.mxu0 0.0
        %278 = vmatpush1.msra.mxu0 0.0
        %279 = vmatprep.subr.mxu0 0.0
        %280 = vmatpush1.msra.mxu0 0.0
        %281 = vmatprep.subr.mxu0 0.0
        %282 = vmatpush1.msra.mxu0 0.0
        %283 = vmatprep.subr.mxu0 0.0
        %284 = vmatpush1.msra.mxu0 0.0
        %285 = vmatprep.mubr.f32.mxu0 0.0
        %286 = vmatmul.mubr.f32.gmra.mrb[0].mxu0 %v219
        %v287 = vpop.f32.mrb[0].mxu0
        %v288 = vadd.f32 %v215, %v287
        %v289 = vpop.f32.mrb[0].mxu0
        %290 = vdwg.mxu0
        %v291 = vmax.f32 %v288, 0.0
        %v292 = vld [vmem:[#allocation2] sm:$0xff]
        %v293 = vld [vmem:[#allocation2 + $0x8] sm:$0xff]
        %v294 = vld [vmem:[#allocation2 + $0x10] sm:$0xff]
        %v295 = vld [vmem:[#allocation2 + $0x18] sm:$0xff]
        %v296 = vld [vmem:[#allocation2 + $0x20] sm:$0xff]
        %v297 = vld [vmem:[#allocation2 + $0x28] sm:$0xff]
        %v298 = vld [vmem:[#allocation2 + $0x30] sm:$0xff]
        %v299 = vld [vmem:[#allocation2 + $0x38] sm:$0xff]
        %v300 = vld [vmem:[#allocation2 + $0x40] sm:$0xff]
        %v301 = vld [vmem:[#allocation2 + $0x48] sm:$0xff]
        %v302 = vld [vmem:[#allocation2 + $0x50] sm:$0xff]
        %v303 = vld [vmem:[#allocation2 + $0x58] sm:$0xff]
        %v304 = vld [vmem:[#allocation2 + $0x60] sm:$0xff]
        %v305 = vld [vmem:[#allocation2 + $0x68] sm:$0xff]
        %v306 = vld [vmem:[#allocation2 + $0x70] sm:$0xff]
        %v307 = vld [vmem:[#allocation2 + $0x78] sm:$0xff]
        %s308 = scalar_lea.vmem %s3, 1
        %v309 = vld [vmem:[%s308] sm:$0x1]
        %v311 = vlaneseq
        %v312 = vshrl.u32 %v311, 7
        %v313 = vsub.s32 0, %v312
        %v314 = vrot.slane %v309, %v313
        %316 = vmatprep.subr.mxu0 0.0
        %317 = vmatpush1.msra.mxu0 %v292
        %318 = vmatprep.subr.mxu0 0.0
        %319 = vmatpush1.msra.mxu0 %v293
        %320 = vmatprep.subr.mxu0 0.0
        %321 = vmatpush1.msra.mxu0 %v294
        %322 = vmatprep.subr.mxu0 0.0
        %323 = vmatpush1.msra.mxu0 %v295
        %324 = vmatprep.subr.mxu0 0.0
        %325 = vmatpush1.msra.mxu0 %v296
        %326 = vmatprep.subr.mxu0 0.0
        %327 = vmatpush1.msra.mxu0 %v297
        %328 = vmatprep.subr.mxu0 0.0
        %329 = vmatpush1.msra.mxu0 %v298
        %330 = vmatprep.subr.mxu0 0.0
        %331 = vmatpush1.msra.mxu0 %v299
        %332 = vmatprep.subr.mxu0 0.0
        %333 = vmatpush1.msra.mxu0 %v300
        %334 = vmatprep.subr.mxu0 0.0
        %335 = vmatpush1.msra.mxu0 %v301
        %336 = vmatprep.subr.mxu0 0.0
        %337 = vmatpush1.msra.mxu0 %v302
        %338 = vmatprep.subr.mxu0 0.0
        %339 = vmatpush1.msra.mxu0 %v303
        %340 = vmatprep.subr.mxu0 0.0
        %341 = vmatpush1.msra.mxu0 %v304
        %342 = vmatprep.subr.mxu0 0.0
        %343 = vmatpush1.msra.mxu0 %v305
        %344 = vmatprep.subr.mxu0 0.0
        %345 = vmatpush1.msra.mxu0 %v306
        %346 = vmatprep.subr.mxu0 0.0
        %347 = vmatpush1.msra.mxu0 %v307
        %348 = vmatprep.subr.mxu0 0.0
        %349 = vmatpush1.msra.mxu0 0.0
        %350 = vmatprep.subr.mxu0 0.0
        %351 = vmatpush1.msra.mxu0 0.0
        %352 = vmatprep.subr.mxu0 0.0
        %353 = vmatpush1.msra.mxu0 0.0
        %354 = vmatprep.subr.mxu0 0.0
        %355 = vmatpush1.msra.mxu0 0.0
        %356 = vmatprep.subr.mxu0 0.0
        %357 = vmatpush1.msra.mxu0 0.0
        %358 = vmatprep.subr.mxu0 0.0
        %359 = vmatpush1.msra.mxu0 0.0
        %360 = vmatprep.subr.mxu0 0.0
        %361 = vmatpush1.msra.mxu0 0.0
        %362 = vmatprep.subr.mxu0 0.0
        %363 = vmatpush1.msra.mxu0 0.0
        %364 = vmatprep.subr.mxu0 0.0
        %365 = vmatpush1.msra.mxu0 0.0
        %366 = vmatprep.subr.mxu0 0.0
        %367 = vmatpush1.msra.mxu0 0.0
        %368 = vmatprep.subr.mxu0 0.0
        %369 = vmatpush1.msra.mxu0 0.0
        %370 = vmatprep.subr.mxu0 0.0
        %371 = vmatpush1.msra.mxu0 0.0
        %372 = vmatprep.subr.mxu0 0.0
        %373 = vmatpush1.msra.mxu0 0.0
        %374 = vmatprep.subr.mxu0 0.0
        %375 = vmatpush1.msra.mxu0 0.0
        %376 = vmatprep.subr.mxu0 0.0
        %377 = vmatpush1.msra.mxu0 0.0
        %378 = vmatprep.subr.mxu0 0.0
        %379 = vmatpush1.msra.mxu0 0.0
        %380 = vmatprep.mubr.f32.mxu0 0.0
        %381 = vmatmul.mubr.f32.gmra.mrb[0].mxu0 %v291
        %v382 = vpop.f32.mrb[0].mxu0
        %v383 = vadd.f32 %v314, %v382
        %v384 = vpop.f32.mrb[0].mxu0
        %385 = vdwg.mxu0
        %v386 = vmax.f32 %v383, 0.0
        %s387 = scalar_lea.vmem [#allocation2], 128
        %v388 = vld [vmem:[%s387] sm:$0xff]
        %v389 = vld [vmem:[%s387 + $0x8] sm:$0xff]
        %v390 = vld [vmem:[%s387 + $0x10] sm:$0xff]
        %v391 = vld [vmem:[%s387 + $0x18] sm:$0xff]
        %v392 = vld [vmem:[%s387 + $0x20] sm:$0xff]
        %v393 = vld [vmem:[%s387 + $0x28] sm:$0xff]
        %v394 = vld [vmem:[%s387 + $0x30] sm:$0xff]
        %v395 = vld [vmem:[%s387 + $0x38] sm:$0xff]
        %v396 = vld [vmem:[%s387 + $0x40] sm:$0xff]
        %v397 = vld [vmem:[%s387 + $0x48] sm:$0xff]
        %v398 = vld [vmem:[%s387 + $0x50] sm:$0xff]
        %v399 = vld [vmem:[%s387 + $0x58] sm:$0xff]
        %v400 = vld [vmem:[%s387 + $0x60] sm:$0xff]
        %v401 = vld [vmem:[%s387 + $0x68] sm:$0xff]
        %v402 = vld [vmem:[%s387 + $0x70] sm:$0xff]
        %v403 = vld [vmem:[%s387 + $0x78] sm:$0xff]
        %s404 = scalar_lea.vmem %s3, 2
        %v405 = vld [vmem:[%s404] sm:$0x1]
        %v407 = vlaneseq
        %v408 = vshrl.u32 %v407, 7
        %v409 = vsub.s32 0, %v408
        %v410 = vrot.slane %v405, %v409
        %412 = vmatprep.subr.mxu0 0.0
        %413 = vmatpush1.msra.mxu0 %v388
        %414 = vmatprep.subr.mxu0 0.0
        %415 = vmatpush1.msra.mxu0 %v389
        %416 = vmatprep.subr.mxu0 0.0
        %417 = vmatpush1.msra.mxu0 %v390
        %418 = vmatprep.subr.mxu0 0.0
        %419 = vmatpush1.msra.mxu0 %v391
        %420 = vmatprep.subr.mxu0 0.0
        %421 = vmatpush1.msra.mxu0 %v392
        %422 = vmatprep.subr.mxu0 0.0
        %423 = vmatpush1.msra.mxu0 %v393
        %424 = vmatprep.subr.mxu0 0.0
        %425 = vmatpush1.msra.mxu0 %v394
        %426 = vmatprep.subr.mxu0 0.0
        %427 = vmatpush1.msra.mxu0 %v395
        %428 = vmatprep.subr.mxu0 0.0
        %429 = vmatpush1.msra.mxu0 %v396
        %430 = vmatprep.subr.mxu0 0.0
        %431 = vmatpush1.msra.mxu0 %v397
        %432 = vmatprep.subr.mxu0 0.0
        %433 = vmatpush1.msra.mxu0 %v398
        %434 = vmatprep.subr.mxu0 0.0
        %435 = vmatpush1.msra.mxu0 %v399
        %436 = vmatprep.subr.mxu0 0.0
        %437 = vmatpush1.msra.mxu0 %v400
        %438 = vmatprep.subr.mxu0 0.0
        %439 = vmatpush1.msra.mxu0 %v401
        %440 = vmatprep.subr.mxu0 0.0
        %441 = vmatpush1.msra.mxu0 %v402
        %442 = vmatprep.subr.mxu0 0.0
        %443 = vmatpush1.msra.mxu0 %v403
        %444 = vmatprep.subr.mxu0 0.0
        %445 = vmatpush1.msra.mxu0 0.0
        %446 = vmatprep.subr.mxu0 0.0
        %447 = vmatpush1.msra.mxu0 0.0
        %448 = vmatprep.subr.mxu0 0.0
        %449 = vmatpush1.msra.mxu0 0.0
        %450 = vmatprep.subr.mxu0 0.0
        %451 = vmatpush1.msra.mxu0 0.0
        %452 = vmatprep.subr.mxu0 0.0
        %453 = vmatpush1.msra.mxu0 0.0
        %454 = vmatprep.subr.mxu0 0.0
        %455 = vmatpush1.msra.mxu0 0.0
        %456 = vmatprep.subr.mxu0 0.0
        %457 = vmatpush1.msra.mxu0 0.0
        %458 = vmatprep.subr.mxu0 0.0
        %459 = vmatpush1.msra.mxu0 0.0
        %460 = vmatprep.subr.mxu0 0.0
        %461 = vmatpush1.msra.mxu0 0.0
        %462 = vmatprep.subr.mxu0 0.0
        %463 = vmatpush1.msra.mxu0 0.0
        %464 = vmatprep.subr.mxu0 0.0
        %465 = vmatpush1.msra.mxu0 0.0
        %466 = vmatprep.subr.mxu0 0.0
        %467 = vmatpush1.msra.mxu0 0.0
        %468 = vmatprep.subr.mxu0 0.0
        %469 = vmatpush1.msra.mxu0 0.0
        %470 = vmatprep.subr.mxu0 0.0
        %471 = vmatpush1.msra.mxu0 0.0
        %472 = vmatprep.subr.mxu0 0.0
        %473 = vmatpush1.msra.mxu0 0.0
        %474 = vmatprep.subr.mxu0 0.0
        %475 = vmatpush1.msra.mxu0 0.0
        %476 = vmatprep.mubr.f32.mxu0 0.0
        %477 = vmatmul.mubr.f32.gmra.mrb[0].mxu0 %v386
        %v478 = vpop.f32.mrb[0].mxu0
        %v479 = vadd.f32 %v410, %v478
        %v480 = vpop.f32.mrb[0].mxu0
        %481 = vdwg.mxu0
        %v482 = vmax.f32 %v479, 0.0
        %s483 = scalar_lea.vmem [#allocation2], 256
        %v484 = vld [vmem:[%s483] sm:$0xff]
        %v485 = vld [vmem:[%s483 + $0x8] sm:$0xff]
        %v486 = vld [vmem:[%s483 + $0x10] sm:$0xff]
        %v487 = vld [vmem:[%s483 + $0x18] sm:$0xff]
        %v488 = vld [vmem:[%s483 + $0x20] sm:$0xff]
        %v489 = vld [vmem:[%s483 + $0x28] sm:$0xff]
        %v490 = vld [vmem:[%s483 + $0x30] sm:$0xff]
        %v491 = vld [vmem:[%s483 + $0x38] sm:$0xff]
        %v492 = vld [vmem:[%s483 + $0x40] sm:$0xff]
        %v493 = vld [vmem:[%s483 + $0x48] sm:$0xff]
        %v494 = vld [vmem:[%s483 + $0x50] sm:$0xff]
        %v495 = vld [vmem:[%s483 + $0x58] sm:$0xff]
        %v496 = vld [vmem:[%s483 + $0x60] sm:$0xff]
        %v497 = vld [vmem:[%s483 + $0x68] sm:$0xff]
        %v498 = vld [vmem:[%s483 + $0x70] sm:$0xff]
        %v499 = vld [vmem:[%s483 + $0x78] sm:$0xff]
        %s500 = scalar_lea.vmem %s3, 3
        %v501 = vld [vmem:[%s500] sm:$0x1]
        %v503 = vlaneseq
        %v504 = vshrl.u32 %v503, 7
        %v505 = vsub.s32 0, %v504
        %v506 = vrot.slane %v501, %v505
        %508 = vmatprep.subr.mxu0 0.0
        %509 = vmatpush1.msra.mxu0 %v484
        %510 = vmatprep.subr.mxu0 0.0
        %511 = vmatpush1.msra.mxu0 %v485
        %512 = vmatprep.subr.mxu0 0.0
        %513 = vmatpush1.msra.mxu0 %v486
        %514 = vmatprep.subr.mxu0 0.0
        %515 = vmatpush1.msra.mxu0 %v487
        %516 = vmatprep.subr.mxu0 0.0
        %517 = vmatpush1.msra.mxu0 %v488
        %518 = vmatprep.subr.mxu0 0.0
        %519 = vmatpush1.msra.mxu0 %v489
        %520 = vmatprep.subr.mxu0 0.0
        %521 = vmatpush1.msra.mxu0 %v490
        %522 = vmatprep.subr.mxu0 0.0
        %523 = vmatpush1.msra.mxu0 %v491
        %524 = vmatprep.subr.mxu0 0.0
        %525 = vmatpush1.msra.mxu0 %v492
        %526 = vmatprep.subr.mxu0 0.0
        %527 = vmatpush1.msra.mxu0 %v493
        %528 = vmatprep.subr.mxu0 0.0
        %529 = vmatpush1.msra.mxu0 %v494
        %530 = vmatprep.subr.mxu0 0.0
        %531 = vmatpush1.msra.mxu0 %v495
        %532 = vmatprep.subr.mxu0 0.0
        %533 = vmatpush1.msra.mxu0 %v496
        %534 = vmatprep.subr.mxu0 0.0
        %535 = vmatpush1.msra.mxu0 %v497
        %536 = vmatprep.subr.mxu0 0.0
        %537 = vmatpush1.msra.mxu0 %v498
        %538 = vmatprep.subr.mxu0 0.0
        %539 = vmatpush1.msra.mxu0 %v499
        %540 = vmatprep.subr.mxu0 0.0
        %541 = vmatpush1.msra.mxu0 0.0
        %542 = vmatprep.subr.mxu0 0.0
        %543 = vmatpush1.msra.mxu0 0.0
        %544 = vmatprep.subr.mxu0 0.0
        %545 = vmatpush1.msra.mxu0 0.0
        %546 = vmatprep.subr.mxu0 0.0
        %547 = vmatpush1.msra.mxu0 0.0
        %548 = vmatprep.subr.mxu0 0.0
        %549 = vmatpush1.msra.mxu0 0.0
        %550 = vmatprep.subr.mxu0 0.0
        %551 = vmatpush1.msra.mxu0 0.0
        %552 = vmatprep.subr.mxu0 0.0
        %553 = vmatpush1.msra.mxu0 0.0
        %554 = vmatprep.subr.mxu0 0.0
        %555 = vmatpush1.msra.mxu0 0.0
        %556 = vmatprep.subr.mxu0 0.0
        %557 = vmatpush1.msra.mxu0 0.0
        %558 = vmatprep.subr.mxu0 0.0
        %559 = vmatpush1.msra.mxu0 0.0
        %560 = vmatprep.subr.mxu0 0.0
        %561 = vmatpush1.msra.mxu0 0.0
        %562 = vmatprep.subr.mxu0 0.0
        %563 = vmatpush1.msra.mxu0 0.0
        %564 = vmatprep.subr.mxu0 0.0
        %565 = vmatpush1.msra.mxu0 0.0
        %566 = vmatprep.subr.mxu0 0.0
        %567 = vmatpush1.msra.mxu0 0.0
        %568 = vmatprep.subr.mxu0 0.0
        %569 = vmatpush1.msra.mxu0 0.0
        %570 = vmatprep.subr.mxu0 0.0
        %571 = vmatpush1.msra.mxu0 0.0
        %572 = vmatprep.mubr.f32.mxu0 0.0
        %573 = vmatmul.mubr.f32.gmra.mrb[0].mxu0 %v482
        %v574 = vpop.f32.mrb[0].mxu0
        %v575 = vadd.f32 %v506, %v574
        %v576 = vpop.f32.mrb[0].mxu0
        %577 = vdwg.mxu0
        %vm578 = vcmask 31744
        %579 = vst.msk [vmem:[%s207] sm:$0xff] %vm578, %v575
        %p580 = scmp.lt.s32.totalorder %s16, 1
        %s581 = scalar_select %p580, %s16, 1
        %s582 = smul.addr %s581, 8
        %s583 = scalar_lea.vmem %s4, %s582
        // Predicated region
        $region41: #{tpu_custom_call.1} parent=35 // pred_check
          %p584 = pneg %p123
        $region42: #{tpu_custom_call.1} parent=35 // pred_check_branch
          %586 = sbr.rel (%p584) target = $region44
        $region43: #{tpu_custom_call.1} parent=35 // pred_region
          _
        $region44: #{tpu_custom_call.1} parent=35 // pred_fallthru
          _
      $region36: #{tpu_custom_call.1} parent=5 // pred_fallthru
        _
      %p587 = scmp.le.s32.totalorder 2, %s11
      // Predicated region
      $region45: #{tpu_custom_call.1} parent=5 // pred_check
        %p588 = pneg %p587
      $region46: #{tpu_custom_call.1} parent=5 // pred_check_branch
        %590 = sbr.rel (%p588) target = $region48
      $region47: #{tpu_custom_call.1} parent=5 // pred_region
        %s591 = ssub.s32 %s11, 2
        // Predicated region
        $region49: #{tpu_custom_call.1} parent=47 // pred_check
          %p592 = pneg %p129
        $region50: #{tpu_custom_call.1} parent=47 // pred_check_branch
          %594 = sbr.rel (%p592) target = $region52
        $region51: #{tpu_custom_call.1} parent=47 // pred_region
          %p595 = scmp.lt.s32.totalorder %s17, 1
          %s596 = scalar_select %p595, %s17, 1
          %s597 = smul.addr %s596, 8
          %s598 = scalar_lea.vmem %s4, %s597
        $region52: #{tpu_custom_call.1} parent=47 // pred_fallthru
          _
      $region48: #{tpu_custom_call.1} parent=5 // pred_fallthru
        _
    $region6: #{tpu_custom_call.1} parent=1 // loop_footer
      %s15 = sadd.s32 1, %s11
    $region7: #{tpu_custom_call.1} parent=1 // loop_footer_branch
      %10 = sbr.rel target = $region3
    $region8: #{tpu_custom_call.1} parent=1 // loop_exit
      _
    %599 = vsyncpa [#allocation3], 1
    %s600 = scalar_lea.sflag [#allocation3], 1
    %601 = vsyncpa %s600, 1

</llo_original>
